<compile_context>
chip_gen: v7x
topology: tpu7x:2x2x1
jax: 0.10.0
libtpu: 0.0.40
codegen_flags: <defaults>
</compile_context>

<pallas_src>
import jax
import jax.numpy as jnp
from jax.experimental import pallas as pl
from jax.experimental.pallas import tpu as pltpu


def embedding_bert_kernel(ids_sm, seg_ref, tok_hbm, pos_ref, seg_tab_ref,
                          out_ref, gather_ref, sem):
    # ids_sm:      (B*S,)     int32  SMEM   scalar-prefetched token ids (drive the gather)
    # seg_ref:     (n_tok, 1) int32  VMEM   segment ids for this tile (lane-broadcast friendly)
    # tok_hbm:     (V, D)            HBM    token table (never copied wholesale into VMEM)
    # pos_ref:     (S, D)            VMEM   rows 0..S-1 of the position table
    # seg_tab_ref: (NS, D)           VMEM   tiny segment table
    # out_ref:     (n_tok, D)        VMEM   lane-dense output block
    # gather_ref:  (n_tok, D)        VMEM   scratch: gathered token rows
    # sem:         (1,)              DMA    single semaphore accumulating all row copies
    n_tok, D = out_ref.shape
    S = pos_ref.shape[0]
    TB = n_tok // S
    base = pl.program_id(0) * n_tok          # flat token offset of this batch tile

    # ---- Phase 1: issue ALL token-row DMAs up front (maximum DMA concurrency). ----
    @pl.loop(0, n_tok)
    def _(t):
        row = ids_sm[base + t]
        pltpu.make_async_copy(tok_hbm.at[pl.ds(row, 1)],
                              gather_ref.at[pl.ds(t, 1)],
                              sem.at[0]).start()

    # ---- Phase 2: position + segment embedding on the VPU while DMAs are in flight.
    seg_ids = seg_ref[...]                                         # (n_tok, 1) int32
    partial = jnp.broadcast_to(
        seg_tab_ref[0, :][None, :].astype(jnp.float32), (n_tok, D))
    for k in range(1, seg_tab_ref.shape[0]):                       # n_segments is tiny (2)
        partial = jnp.where(seg_ids == k,
                            seg_tab_ref[k, :][None, :].astype(jnp.float32),
                            partial)
    partial = partial + jnp.tile(pos_ref[...].astype(jnp.float32), (TB, 1))

    # ---- Phase 3: one bulk wait for all n_tok rows, then add + lane-dense store. --
    # The wait descriptor spans the whole gather buffer; its byte count equals the
    # sum of the n_tok per-row (1, D) copies issued above, so a single wait drains
    # exactly what was signaled.
    pltpu.make_async_copy(gather_ref, gather_ref, sem.at[0]).wait()

    out_ref[...] = (gather_ref[...].astype(jnp.float32) + partial).astype(out_ref.dtype)


def _vmem_capacity_bytes():
    try:
        info = pltpu.get_tpu_info()
        for attr in ("vmem_capacity_bytes", "vmem_bytes", "vmem_size_bytes"):
            v = getattr(info, attr, None)
            if v:
                return int(v)
    except Exception:
        pass
    return 64 << 20                      # conservative default (v7x-sized VMEM)


def _pick_batch_tile(B, S, D, itemsize, budget_bytes):
    """Largest batch tile that (a) divides B, (b) keeps the out block within the VMEM
    budget, (c) keeps the flat (TB*S, D) block sublane-legal, and (d) leaves >= 2 grid
    steps when B > 1 (so v7x's two TensorCores both get batch tiles)."""
    per_row = S * D * itemsize
    divisors = [tb for tb in range(B, 0, -1) if B % tb == 0]

    def legal(tb):
        return (tb * S) % 8 == 0 or tb == B     # (8,128) sublane rule for flat blocks

    for want_multi_step in (True, False):
        for tb in divisors:
            if want_multi_step and B > 1 and tb == B:
                continue
            if legal(tb) and tb * per_row <= budget_bytes:
                return tb
    return B                                     # full-extent fallback (grid of 1)


def embedding_bert_forward(x, seg, tok_table, pos_table, seg_table, *, batch_tile=None):
    B, S = x.shape
    V, D = tok_table.shape
    NS = seg_table.shape[0]
    assert S <= pos_table.shape[0], "seq_len must be <= maxlen"

    itemsize = jnp.dtype(tok_table.dtype).itemsize
    vmem_cap = _vmem_capacity_bytes()
    if vmem_cap >= (100 << 20):          # v5e / v6e: 128 MiB VMEM -> bigger tiles
        budget, limit_cap = 16 << 20, 96 << 20
    else:                                # v7x: 64 MiB per TensorCore -> stay modest
        budget, limit_cap = 6 << 20, 48 << 20

    TB = batch_tile if batch_tile is not None else _pick_batch_tile(B, S, D, itemsize, budget)
    assert B % TB == 0
    n_tok = TB * S

    ids_flat = jnp.clip(x.reshape(-1).astype(jnp.int32), 0, V - 1)  # -> SMEM (prefetch)
    seg_flat = seg.reshape(-1, 1).astype(jnp.int32)                 # (B*S, 1): lane dim = 1
    pos_rows = pos_table[:S]                                        # pos = arange(S)

    block_bytes = (2 * n_tok * D * itemsize    # out block (double-buffered)
                   + n_tok * D * itemsize      # gather scratch
                   + 2 * S * D * itemsize      # position rows
                   + 2 * NS * D * itemsize     # segment table
                   + 2 * n_tok * 4)            # segment ids
    vmem_limit = int(min(max(block_bytes + (8 << 20), 32 << 20), limit_cap))

    out_flat = pl.pallas_call(
        embedding_bert_kernel,
        out_shape=jax.ShapeDtypeStruct((B * S, D), tok_table.dtype),
        grid_spec=pltpu.PrefetchScalarGridSpec(
            num_scalar_prefetch=1,                                  # token ids -> SMEM
            grid=(B // TB,),
            in_specs=[
                pl.BlockSpec((n_tok, 1), lambda g, ids: (g, 0)),    # segment ids (VMEM)
                pl.BlockSpec(memory_space=pl.ANY),                  # token table stays in HBM
                pl.BlockSpec((S, D), lambda g, ids: (0, 0)),        # position rows (constant)
                pl.BlockSpec((NS, D), lambda g, ids: (0, 0)),       # segment table (constant)
            ],
            out_specs=pl.BlockSpec((n_tok, D), lambda g, ids: (g, 0)),
            scratch_shapes=[
                pltpu.VMEM((n_tok, D), tok_table.dtype),            # gathered token rows
                pltpu.SemaphoreType.DMA((1,)),                      # single sem, bulk-waited
            ],
        ),
        compiler_params=pltpu.CompilerParams(
            dimension_semantics=("parallel",),     # batch tiles independent (v7x: 2 TCs)
            vmem_limit_bytes=vmem_limit,
        ),
    )(ids_flat, seg_flat, tok_table, pos_rows, seg_table)

    return out_flat.reshape(B, S, D)


if __name__ == "__main__":
    # Small shapes consistent with the module's forward.
    vocab_size, d_model, maxlen, n_segments = 32, 32, 16, 2
    B, S = 2, 8

    key = jax.random.PRNGKey(0)
    k1, k2, k3, k4, k5 = jax.random.split(key, 5)
    # Deterministic "parameters" (stand-ins for nn.Embedding weights).
    tok_table = jax.random.normal(k1, (vocab_size, d_model), jnp.float32)
    pos_table = jax.random.normal(k2, (maxlen, d_model), jnp.float32)
    seg_table = jax.random.normal(k3, (n_segments, d_model), jnp.float32)
    # Inputs: token ids and segment ids.
    x = jax.random.randint(k4, (B, S), 0, vocab_size, dtype=jnp.int32)
    seg = jax.random.randint(k5, (B, S), 0, n_segments, dtype=jnp.int32)

    out = embedding_bert_forward(x, seg, tok_table, pos_table, seg_table)
    out = jax.block_until_ready(out)

    # Pure-JAX reference of the PyTorch forward.
    pos = jnp.arange(S)
    ref = tok_table[x] + pos_table[pos][None, :, :] + seg_table[seg]

    assert out.shape == (B, S, d_model)
    assert jnp.allclose(out, ref, atol=1e-5), "Pallas kernel mismatch vs reference"
    print("KERNEL_OK")
</pallas_src>

<mosaic_0001>
module attributes {stable_mosaic.version = 11 : i64} {
  func.func @embedding_bert_kernel(%arg0: i32, %arg1: memref<16xi32, #tpu.memory_space<smem>>, %arg2: memref<8x1xi32, #tpu.memory_space<vmem>>, %arg3: memref<32x32xf32, #tpu.memory_space<any>>, %arg4: memref<8x32xf32, #tpu.memory_space<vmem>>, %arg5: memref<2x32xf32, #tpu.memory_space<vmem>>, %arg6: memref<8x32xf32, #tpu.memory_space<vmem>>, %arg7: memref<8x32xf32, #tpu.memory_space<vmem>>, %arg8: memref<1x!tpu.dma_semaphore, #tpu.memory_space<semaphore_mem>>) attributes {dimension_semantics = [#tpu.dimension_semantics<parallel>], iteration_bounds = array<i64: 2>, scalar_prefetch = 1 : i64, scratch_operands = 2 : i64, tpu.core_type = #tpu.core_type<tc>, window_params = [{transform_indices = @transform_0, window_bounds = array<i64: 8, 1>}, {}, {pipeline_mode = #tpu.pipeline_mode<synchronous>, transform_indices = @transform_2, window_bounds = array<i64: 8, 32>}, {pipeline_mode = #tpu.pipeline_mode<synchronous>, transform_indices = @transform_3, window_bounds = array<i64: 2, 32>}, {transform_indices = @transform_4, window_bounds = array<i64: 8, 32>}]} {
    %c8_i32 = arith.constant 8 : i32
    %0 = arith.muli %arg0, %c8_i32 : i32
    %c0_i32 = arith.constant 0 : i32
    %c8_i32_0 = arith.constant 8 : i32
    %1 = arith.addi %c0_i32, %c8_i32_0 : i32
    %c1_i32 = arith.constant 1 : i32
    scf.for %arg9 = %c0_i32 to %1 step %c1_i32  : i32 {
      %c1_i32_14 = arith.constant 1 : i32
      %25 = arith.muli %arg9, %c1_i32_14 : i32
      %c0_i32_15 = arith.constant 0 : i32
      %26 = arith.addi %c0_i32_15, %25 : i32
      %27 = arith.addi %0, %26 : i32
      %28 = arith.index_cast %27 : i32 to index
      %29 = memref.load %arg1[%28] : memref<16xi32, #tpu.memory_space<smem>>
      %c0_i32_16 = arith.constant 0 : i32
      %c0_i32_17 = arith.constant 0 : i32
      %30 = tpu.memref_slice %arg3[%29, %c0_i32_17] : memref<32x32xf32, #tpu.memory_space<any>> -> memref<1x32xf32, #tpu.memory_space<any>>
      %c0_i32_18 = arith.constant 0 : i32
      %31 = tpu.memref_slice %arg7[%26, %c0_i32_18] : memref<8x32xf32, #tpu.memory_space<vmem>> -> memref<1x32xf32, #tpu.memory_space<vmem>>
      %32 = tpu.memref_slice %arg8[%c0_i32_16] : memref<1x!tpu.dma_semaphore, #tpu.memory_space<semaphore_mem>> -> memref<1x!tpu.dma_semaphore, #tpu.memory_space<semaphore_mem>>
      %33 = tpu.memref_squeeze %32 : memref<1x!tpu.dma_semaphore, #tpu.memory_space<semaphore_mem>> -> memref<!tpu.dma_semaphore, #tpu.memory_space<semaphore_mem>>
      tpu.enqueue_dma source(%30 : memref<1x32xf32, #tpu.memory_space<any>>) target(%31 : memref<1x32xf32, #tpu.memory_space<vmem>>) target_semaphore(%33 : memref<!tpu.dma_semaphore, #tpu.memory_space<semaphore_mem>>)
    }
    %c8_i32_1 = arith.constant 8 : i32
    %c0 = arith.constant 0 : index
    %c0_2 = arith.constant 0 : index
    %2 = vector.load %arg2[%c0, %c0_2] : memref<8x1xi32, #tpu.memory_space<vmem>>, vector<8x1xi32>
    %c0_3 = arith.constant 0 : index
    %c0_4 = arith.constant 0 : index
    %3 = vector.load %arg5[%c0_3, %c0_4] : memref<2x32xf32, #tpu.memory_space<vmem>>, vector<1x32xf32>
    %4 = vector.shape_cast %3 : vector<1x32xf32> to vector<32xf32>
    %5 = vector.shape_cast %4 : vector<32xf32> to vector<1x32xf32>
    %6 = vector.shape_cast %5 : vector<1x32xf32> to vector<1x32xf32>
    %7 = vector.broadcast %6 : vector<1x32xf32> to vector<8x32xf32>
    %c1_i32_5 = arith.constant 1 : i32
    %8 = vector.broadcast %c1_i32_5 : i32 to vector<8x1xi32>
    %9 = arith.cmpi eq, %2, %8 : vector<8x1xi32>
    %c1 = arith.constant 1 : index
    %c0_6 = arith.constant 0 : index
    %10 = vector.load %arg5[%c1, %c0_6] : memref<2x32xf32, #tpu.memory_space<vmem>>, vector<1x32xf32>
    %11 = vector.shape_cast %10 : vector<1x32xf32> to vector<32xf32>
    %12 = vector.shape_cast %11 : vector<32xf32> to vector<1x32xf32>
    %13 = vector.shape_cast %9 : vector<8x1xi1> to vector<8x1xi1>
    %14 = vector.broadcast %13 : vector<8x1xi1> to vector<8x32xi1>
    %15 = vector.shape_cast %12 : vector<1x32xf32> to vector<1x32xf32>
    %16 = vector.broadcast %15 : vector<1x32xf32> to vector<8x32xf32>
    %17 = arith.select %14, %16, %7 : vector<8x32xi1>, vector<8x32xf32>
    %c0_7 = arith.constant 0 : index
    %c0_8 = arith.constant 0 : index
    %18 = vector.load %arg4[%c0_7, %c0_8] : memref<8x32xf32, #tpu.memory_space<vmem>>, vector<8x32xf32>
    %19 = arith.addf %17, %18 : vector<8x32xf32>
    %c0_i32_9 = arith.constant 0 : i32
    %20 = tpu.memref_slice %arg8[%c0_i32_9] : memref<1x!tpu.dma_semaphore, #tpu.memory_space<semaphore_mem>> -> memref<1x!tpu.dma_semaphore, #tpu.memory_space<semaphore_mem>>
    %21 = tpu.memref_squeeze %20 : memref<1x!tpu.dma_semaphore, #tpu.memory_space<semaphore_mem>> -> memref<!tpu.dma_semaphore, #tpu.memory_space<semaphore_mem>>
    tpu.wait_dma2 semaphore(%21 : memref<!tpu.dma_semaphore, #tpu.memory_space<semaphore_mem>>) src(%arg7 : memref<8x32xf32, #tpu.memory_space<vmem>>) dst(%arg7 : memref<8x32xf32, #tpu.memory_space<vmem>>)
    %c0_10 = arith.constant 0 : index
    %c0_11 = arith.constant 0 : index
    %22 = vector.load %arg7[%c0_10, %c0_11] : memref<8x32xf32, #tpu.memory_space<vmem>>, vector<8x32xf32>
    %23 = arith.addf %22, %19 : vector<8x32xf32>
    %c0_12 = arith.constant 0 : index
    %c0_13 = arith.constant 0 : index
    %24 = vector.load %arg6[%c0_12, %c0_13] : memref<8x32xf32, #tpu.memory_space<vmem>>, vector<8x32xf32>
    tpu.vector_store %arg6[%c0_12, %c0_13], %23 {strides = array<i32>} : memref<8x32xf32, #tpu.memory_space<vmem>>, vector<8x32xf32>,
    return
  }
  func.func @transform_0(%arg0: i32, %arg1: memref<16xi32, #tpu.memory_space<smem>>) -> (i32, i32) {
    %c0_i32 = arith.constant 0 : i32
    %c0_i32_0 = arith.constant 0 : i32
    return %arg0, %c0_i32 : i32, i32
  }
  func.func @transform_2(%arg0: i32, %arg1: memref<16xi32, #tpu.memory_space<smem>>) -> (i32, i32) {
    %c0_i32 = arith.constant 0 : i32
    %c0_i32_0 = arith.constant 0 : i32
    %c0_i32_1 = arith.constant 0 : i32
    return %c0_i32, %c0_i32_0 : i32, i32
  }
  func.func @transform_3(%arg0: i32, %arg1: memref<16xi32, #tpu.memory_space<smem>>) -> (i32, i32) {
    %c0_i32 = arith.constant 0 : i32
    %c0_i32_0 = arith.constant 0 : i32
    %c0_i32_1 = arith.constant 0 : i32
    return %c0_i32, %c0_i32_0 : i32, i32
  }
  func.func @transform_4(%arg0: i32, %arg1: memref<16xi32, #tpu.memory_space<smem>>) -> (i32, i32) {
    %c0_i32 = arith.constant 0 : i32
    %c0_i32_0 = arith.constant 0 : i32
    return %arg0, %c0_i32 : i32, i32
  }
}

</mosaic_0001>

<llo_original>
// kernel: tpu_custom_call.1
$region0: #{tpu_custom_call.1}
  #allocation0 [shape = 'u32[]', space=smem, size = 0x4, offset = 0x4, fixed_abs, tag = 'smem constant byte address 0x4 - core index']
  #allocation1 [shape = 'u32[144,128]{1,0:T(1,128)}', space=vmem, size = 0x12000, scoped, tag = 'internal scratch']
  #allocation2 [shape = 'f32[8,32]{1,0:T(8,128)}', space=vmem, size = 0x1000, scoped, tag = 'scratch operand']
  #allocation3 [shape = 's32[1]{0}', space=sflag, size = 0x4, scoped, tag = 'scratch operand']
  #allocation4 [shape = 's32[1]{0}', space=sflag, size = 0x4, scoped, tag = 'scoped memory for tpu_custom_call.1']
  #allocation5 [shape = 'u8[512]{0}', space=smem, size = 0x200, scoped, tag = 'prefetched SMEM operand 0']
  #allocation8 [shape = 's32[]', space=sflag, size = 0x4, offset = 0, fixed_abs, tag = 'sflag constant byte address 0x0 - dummy sync flag']
  #allocation9 [shape = 's32[]', space=sflag, size = 0x4, offset = 0, fixed_abs, tag = 'sflag constant byte address 0x0 - dummy sync flag']
  #allocation10 [shape = 'u32[]', space=smem, size = 0x4, offset = 0x44, fixed_abs, tag = 'smem constant byte address 0x44 - assertion arg 0']
  #allocation11 [shape = 'u32[]', space=smem, size = 0x4, offset = 0x48, fixed_abs, tag = 'smem constant byte address 0x48 - assertion arg 1']
  %s0 = inlined_call_operand.vmem [shape: s32[16], index: 0, kind: input, shape index: {}]
  %s1 = inlined_call_operand.vmem [shape: s32[16,1], index: 1, kind: input, shape index: {}]
  %s2 = inlined_call_operand.hbm [shape: f32[32,32], index: 2, kind: input, shape index: {}]
  %s3 = inlined_call_operand.vmem [shape: f32[8,32], index: 3, kind: input, shape index: {}]
  %s4 = inlined_call_operand.vmem [shape: f32[2,32], index: 4, kind: input, shape index: {}]
  %s5 = inlined_call_operand.hbm [shape: f32[16,32], index: 5, kind: output, shape index: {}]
  %s6 = sld [smem:[#allocation0]]
  $region56: #{tpu_custom_call.1} parent=0
    _
  %s8 = ssub.s32 1, %s6
  %s9 = scalar_select 0, %s8, %s6
  %s10 = sshll.u32 %s0, 4
  %s11 = int_to_ptr.vmem [resolvable:$true] %s10
  %13 = dma.vmem_to_smem %s11, 16, [#allocation5], [#allocation4]
  %14 = dma.done [#allocation4], 16
  %15 = sfence
  $region1: #{tpu_custom_call.1} parent=0
    #allocation6 [shape = 'u8[8192]{0}', space=vmem, size = 0x2000, scoped, tag = 'output window, operand 0']
    #allocation7 [shape = 's32[2]{0}', space=sflag, size = 0x8, scoped, tag = 'scoped memory for tpu_custom_call.1']
    %16 = vsyncpa [#allocation7], 0
    %s17 = scalar_lea.sflag [#allocation7], 1
    %18 = vsyncpa %s17, 0
    loop: start=0, step=1, limit=4
    $region2: #{tpu_custom_call.1} parent=1 // loop_pre_header
      _
    $region3: #{tpu_custom_call.1} parent=1 // loop_header
      %s20 = sphi 0, %s24
      %p21 = scmp.ge.s32.totalorder %s20, 4
      %s30 = sphi 0, %s32
      %s33 = sphi 0, %s30
      %s34 = sphi 0, %s33
      %s50 = sphi 0, %s34
      %s54 = sphi 0, %s54
      %s56 = sphi 0, %s54
      %s57 = sphi 0, %s56
      %s71 = sphi 0, %s57
      %s75 = sphi 0, %s75
      %s77 = sphi 0, %s75
      %s78 = sphi 0, %s77
      %s92 = sphi 0, %s78
      %s98 = sphi 0, %s100
      %s101 = sphi 0, %s98
      %s102 = sphi 0, %s101
      %s118 = sphi 0, %s102
    $region4: #{tpu_custom_call.1} parent=1 // loop_header_branch
      %23 = sbr.rel (%p21) target = $region8
    $region5: #{tpu_custom_call.1} parent=1 // loop_body
      %s25 = ssub.s32 %s20, 1
      %s26 = ssub.s32 %s20, 2
      %s27 = sadd.s32 %s20, 1
      %s28 = ssub.s32 %s20, %s27
      %p29 = scmp.eq.s32.totalorder %s28, 0
      %s31 = sadd.s32 %s30, 1
      %s32 = scalar_select %p29, %s30, %s31
      %p35 = pneg %p29
      %p36 = scmp.eq.s32.totalorder %s20, 1
      %p37 = por %p35, %p36
      %p38 = scmp.ne.s32.totalorder %s30, %s33
      %p39 = scmp.eq.s32.totalorder %s20, 0
      %p40 = por %p38, %p39
      %p41 = scmp.ne.s32.totalorder %s30, %s33
      %p42 = scmp.eq.s32.totalorder %s25, 1
      %p43 = por %p41, %p42
      %p44 = scmp.ne.s32.totalorder %s33, %s34
      %p45 = scmp.eq.s32.totalorder %s25, 0
      %p46 = por %p44, %p45
      %p47 = scmp.ne.s32.totalorder %s33, %s34
      %p48 = scmp.eq.s32.totalorder %s26, 1
      %p49 = por %p47, %p48
      %p51 = scmp.ne.s32.totalorder %s34, %s50
      %p52 = scmp.eq.s32.totalorder %s26, 0
      %p53 = por %p51, %p52
      %s55 = sadd.s32 %s54, 1
      %p58 = scmp.eq.s32.totalorder %s20, 1
      %p59 = scmp.ne.s32.totalorder %s54, %s56
      %p60 = scmp.eq.s32.totalorder %s20, 0
      %p61 = por %p59, %p60
      %p62 = scmp.ne.s32.totalorder %s54, %s56
      %p63 = scmp.eq.s32.totalorder %s25, 1
      %p64 = por %p62, %p63
      %p65 = scmp.ne.s32.totalorder %s56, %s57
      %p66 = scmp.eq.s32.totalorder %s25, 0
      %p67 = por %p65, %p66
      %p68 = scmp.ne.s32.totalorder %s56, %s57
      %p69 = scmp.eq.s32.totalorder %s26, 1
      %p70 = por %p68, %p69
      %p72 = scmp.ne.s32.totalorder %s57, %s71
      %p73 = scmp.eq.s32.totalorder %s26, 0
      %p74 = por %p72, %p73
      %s76 = sadd.s32 %s75, 1
      %p79 = scmp.eq.s32.totalorder %s20, 1
      %p80 = scmp.ne.s32.totalorder %s75, %s77
      %p81 = scmp.eq.s32.totalorder %s20, 0
      %p82 = por %p80, %p81
      %p83 = scmp.ne.s32.totalorder %s75, %s77
      %p84 = scmp.eq.s32.totalorder %s25, 1
      %p85 = por %p83, %p84
      %p86 = scmp.ne.s32.totalorder %s77, %s78
      %p87 = scmp.eq.s32.totalorder %s25, 0
      %p88 = por %p86, %p87
      %p89 = scmp.ne.s32.totalorder %s77, %s78
      %p90 = scmp.eq.s32.totalorder %s26, 1
      %p91 = por %p89, %p90
      %p93 = scmp.ne.s32.totalorder %s78, %s92
      %p94 = scmp.eq.s32.totalorder %s26, 0
      %p95 = por %p93, %p94
      %s96 = ssub.s32 %s20, %s27
      %p97 = scmp.eq.s32.totalorder %s96, 0
      %s99 = sadd.s32 %s98, 1
      %s100 = scalar_select %p97, %s98, %s99
      %p103 = pneg %p97
      %p104 = scmp.eq.s32.totalorder %s20, 1
      %p105 = por %p103, %p104
      %p106 = scmp.ne.s32.totalorder %s98, %s101
      %p107 = scmp.eq.s32.totalorder %s20, 0
      %p108 = por %p106, %p107
      %p109 = scmp.ne.s32.totalorder %s98, %s101
      %p110 = scmp.eq.s32.totalorder %s25, 1
      %p111 = por %p109, %p110
      %p112 = scmp.ne.s32.totalorder %s101, %s102
      %p113 = scmp.eq.s32.totalorder %s25, 0
      %p114 = por %p112, %p113
      %p115 = scmp.ne.s32.totalorder %s101, %s102
      %p116 = scmp.eq.s32.totalorder %s26, 1
      %p117 = por %p115, %p116
      %p119 = scmp.ne.s32.totalorder %s102, %s118
      %p120 = scmp.eq.s32.totalorder %s26, 0
      %p121 = por %p119, %p120
      %p122 = scmp.le.s32.totalorder 1, %s20
      %p123 = scmp.lt.s32.totalorder %s20, 3
      %p124 = pnand %p122, %p123
      %p125 = pneg %p124
      // Predicated region
      $region9: #{tpu_custom_call.1} parent=5 // pred_check
        _
      $region10: #{tpu_custom_call.1} parent=5 // pred_check_branch
        %127 = sbr.rel (%p124) target = $region12
      $region11: #{tpu_custom_call.1} parent=5 // pred_region
        %s128 = ssub.s32 %s20, 1
        // Predicated region
        $region13: #{tpu_custom_call.1} parent=11 // pred_check
          %p129 = pneg %p67
        $region14: #{tpu_custom_call.1} parent=11 // pred_check_branch
          %131 = sbr.rel (%p129) target = $region16
        $region15: #{tpu_custom_call.1} parent=11 // pred_region
          _
        $region16: #{tpu_custom_call.1} parent=11 // pred_fallthru
          _
        // Predicated region
        $region17: #{tpu_custom_call.1} parent=11 // pred_check
          %p132 = pneg %p88
        $region18: #{tpu_custom_call.1} parent=11 // pred_check_branch
          %134 = sbr.rel (%p132) target = $region20
        $region19: #{tpu_custom_call.1} parent=11 // pred_region
          _
        $region20: #{tpu_custom_call.1} parent=11 // pred_fallthru
          _
      $region12: #{tpu_custom_call.1} parent=5 // pred_fallthru
        _
      %p135 = scmp.lt.s32.totalorder %s20, 2
      // Predicated region
      $region21: #{tpu_custom_call.1} parent=5 // pred_check
        %p136 = pneg %p135
      $region22: #{tpu_custom_call.1} parent=5 // pred_check_branch
        %138 = sbr.rel (%p136) target = $region24
      $region23: #{tpu_custom_call.1} parent=5 // pred_region
        // Predicated region
        $region25: #{tpu_custom_call.1} parent=23 // pred_check
          %p139 = pneg %p40
        $region26: #{tpu_custom_call.1} parent=23 // pred_check_branch
          %141 = sbr.rel (%p139) target = $region28
        $region27: #{tpu_custom_call.1} parent=23 // pred_region
          %p142 = scmp.lt.s32.totalorder %s20, 1
          %s143 = scalar_select %p142, %s20, 1
          %s144 = smul.addr %s143, 8
          %s145 = scalar_lea.vmem %s1, %s144
        $region28: #{tpu_custom_call.1} parent=23 // pred_fallthru
          _
      $region24: #{tpu_custom_call.1} parent=5 // pred_fallthru
        _
      %p146 = scmp.le.s32.totalorder 1, %s20
      %p147 = scmp.lt.s32.totalorder %s20, 3
      %p148 = pnand %p146, %p147
      %p149 = pneg %p148
      // Predicated region
      $region29: #{tpu_custom_call.1} parent=5 // pred_check
        _
      $region30: #{tpu_custom_call.1} parent=5 // pred_check_branch
        %151 = sbr.rel (%p148) target = $region32
      $region31: #{tpu_custom_call.1} parent=5 // pred_region
        %s152 = ssub.s32 %s20, 1
        %p153 = scmp.lt.s32.totalorder %s25, 1
        %s154 = scalar_select %p153, %s25, 1
        %s155 = smul.addr %s154, 8
        %s156 = scalar_lea.vmem %s1, %s155
        %p157 = pneg %p46
        %p158 = pneg %p43
        %p159 = pneg %p67
        %p160 = pneg %p64
        %p161 = pneg %p88
        %p162 = pneg %p85
        %p163 = pneg %p114
        %p164 = pneg %p111
        %s165 = sand.u32 %s101, 1
        %s166 = scalar_lea.sflag [#allocation7], %s165
        %s167 = sand.u32 %s101, 1
        %s168 = smul.addr %s167, 8
        %s169 = scalar_lea.vmem [#allocation6], %s168
        %p170 = scmp.lt.s32.totalorder %s25, 1
        %s171 = scalar_select %p170, %s25, 1
        %s172 = smul.addr %s171, 8
        %s173 = scalar_lea.vmem %s1, %s172
        %s174 = smul.u32 %s25, 8
        loop: start=0, step=1, limit=8
        $region33: #{tpu_custom_call.1} parent=31 // loop_pre_header
          _
        $region34: #{tpu_custom_call.1} parent=31 // loop_header
          %s176 = sphi 0, %s180
          %p177 = scmp.ge.s32.totalorder %s176, 8
        $region35: #{tpu_custom_call.1} parent=31 // loop_header_branch
          %179 = sbr.rel (%p177) target = $region39
        $region36: #{tpu_custom_call.1} parent=31 // loop_body
          %s181 = sadd.s32 %s174, %s176
          %s182 = sld [smem:[#allocation5 + %s181]]
          %s183 = smul.addr %s182, 16
          %s184 = scalar_lea.hbm %s2, %s183
          %s185 = scalar_lea.vmem [#allocation2], %s176
          // Predicated region
          $region40: #{tpu_custom_call.1} parent=36 // pred_check
            _
          $region41: #{tpu_custom_call.1} parent=36 // pred_check_branch
            %187 = sbr.rel target = $region43
          $region42: #{tpu_custom_call.1} parent=36 // pred_region
            %188 = sst [smem:[#allocation10]] [#allocation9]
            %189 = sst [smem:[#allocation11]] [#allocation8]
          $region43: #{tpu_custom_call.1} parent=36 // pred_fallthru
            _
          %191 = shalt.err (0)
          %s193 = sshll.u32 %s185, 4
          %s194 = int_to_ptr.vmem [resolvable:$true] %s193
          %196 = dma.hbm_to_vmem [thread:$0]  %s184, 16, %s194, [#allocation3]
        $region37: #{tpu_custom_call.1} parent=31 // loop_footer
          %s180 = sadd.s32 1, %s176
        $region38: #{tpu_custom_call.1} parent=31 // loop_footer_branch
          %175 = sbr.rel target = $region34
        $region39: #{tpu_custom_call.1} parent=31 // loop_exit
          _
        %v197 = vld [vmem:[%s173] sm:$0xff]
        %v198 = vld [vmem:[%s4] sm:$0x1]
        %v199 = vlaneseq
        %v200 = vshrl.u32 %v199, 7
        %v201 = vsub.s32 0, %v200
        %v202 = vrot.slane %v198, %v201
        %vm203 = vcmp.eq.s32.totalorder %v197, 1
        %v204 = vld [vmem:[%s4 + $0x1] sm:$0x1]
        %v205 = vsel %vm203, 1, 0
        %206 = vset.pattern.permute.xlu0 0
        %207 = vperm.xlu0 %206, %v205
        %v208 = vpop.permute.xlu0 %207
        %vm209 = vcmp.eq.s32.totalorder %v208, 1
        %v210 = vlaneseq
        %v211 = vshrl.u32 %v210, 7
        %v212 = vsub.s32 0, %v211
        %v213 = vrot.slane %v204, %v212
        %v214 = vsel %vm209, %v213, %v202
        %v215 = vld [vmem:[%s3] sm:$0xff]
        %v216 = vadd.f32 %v214, %v215
        %s217 = smul.u32 8, 1
        %s218 = sshll.u32 %s217, 4
        %219 = dma.done [#allocation3], %s218
        %v220 = vld [vmem:[#allocation2] sm:$0xff]
        %v221 = vadd.f32 %v220, %v216
        %vm222 = vcmask 261120
        %223 = vst.msk [vmem:[%s169] sm:$0xff] %vm222, %v221
        %s224 = sand.u32 %s101, 1
        %s225 = scalar_lea.sflag [#allocation7], %s224
        %s226 = sand.u32 %s101, 1
        %s227 = smul.addr %s226, 8
        %s228 = scalar_lea.vmem [#allocation6], %s227
        // Predicated region
        $region44: #{tpu_custom_call.1} parent=31 // pred_check
          %p229 = pneg %p111
        $region45: #{tpu_custom_call.1} parent=31 // pred_check_branch
          %231 = sbr.rel (%p229) target = $region47
        $region46: #{tpu_custom_call.1} parent=31 // pred_region
          %s233 = ssub.s32 128, 128
          %234 = vsyncadd %s225, %s233
          %s235 = smul.addr %s25, 128
          %s236 = scalar_lea.hbm %s5, %s235
          %s238 = sshll.u32 %s228, 4
          %s239 = int_to_ptr.vmem [resolvable:$true] %s238
          %241 = dma.vmem_to_hbm [thread:$0]  %s239, 128, %s236, %s225
        $region47: #{tpu_custom_call.1} parent=31 // pred_fallthru
          _
      $region32: #{tpu_custom_call.1} parent=5 // pred_fallthru
        _
      %p242 = scmp.le.s32.totalorder 2, %s20
      // Predicated region
      $region48: #{tpu_custom_call.1} parent=5 // pred_check
        %p243 = pneg %p242
      $region49: #{tpu_custom_call.1} parent=5 // pred_check_branch
        %245 = sbr.rel (%p243) target = $region51
      $region50: #{tpu_custom_call.1} parent=5 // pred_region
        %s246 = ssub.s32 %s20, 2
        // Predicated region
        $region52: #{tpu_custom_call.1} parent=50 // pred_check
          %p247 = pneg %p117
        $region53: #{tpu_custom_call.1} parent=50 // pred_check_branch
          %249 = sbr.rel (%p247) target = $region55
        $region54: #{tpu_custom_call.1} parent=50 // pred_region
          %s250 = sand.u32 %s102, 1
          %s251 = scalar_lea.sflag [#allocation7], %s250
          %s252 = sand.u32 %s102, 1
          %s253 = smul.addr %s252, 8
          %s254 = scalar_lea.vmem [#allocation6], %s253
          %255 = dma.done %s251, 128
        $region55: #{tpu_custom_call.1} parent=50 // pred_fallthru
          _
      $region51: #{tpu_custom_call.1} parent=5 // pred_fallthru
        _
    $region6: #{tpu_custom_call.1} parent=1 // loop_footer
      %s24 = sadd.s32 1, %s20
    $region7: #{tpu_custom_call.1} parent=1 // loop_footer_branch
      %19 = sbr.rel target = $region3
    $region8: #{tpu_custom_call.1} parent=1 // loop_exit
      _
    %256 = vsyncpa [#allocation7], 1
    %s257 = scalar_lea.sflag [#allocation7], 1
    %258 = vsyncpa %s257, 1
  %259 = vsyncmov [#allocation3]
  %s260 = vpop.sfrf %259
  %p261 = scmp.eq.s32.totalorder %s260, 0
  %p262 = pneg %p261
  %264 = shalt.err (%p262)

</llo_original>
